<compile_context>
chip_gen: v6e
topology: v6e:2x2x1
jax: 0.10.0
libtpu: 0.0.40
codegen_flags: <defaults>
</compile_context>

<pallas_src>
import jax
import jax.numpy as jnp
from jax.experimental import pallas as pl
from jax.experimental.pallas import tpu as pltpu


def _mlp_kernel(x_ref, w1_ref, b1_ref, w2_ref, b2_ref, o_ref):
    # x_ref : (D, tile_r, 128) f32 in VMEM  (per-feature dense (sublane, lane) planes)
    # w1_ref: (D, H) f32 in SMEM, b1_ref: (H,), w2_ref: (H,), b2_ref: (1,)  (scalars)
    # o_ref : (tile_r, 128) f32 in VMEM     (dense output slab)
    D, H = w1_ref.shape                      # static Python ints

    y = None
    for j in range(H):                       # unrolled: H == hidden_dim (2)
        # fold the hidden bias into the first multiply-add
        h = x_ref[0] * w1_ref[0, j] + b1_ref[j]
        for d in range(1, D):                # unrolled: D == input_dim (4)
            h = h + x_ref[d] * w1_ref[d, j]  # VPU FMA, scalar operand from SMEM
        t = jnp.maximum(h, 0.0) * w2_ref[j]  # ReLU + FMA
        y = t if y is None else y + t
    o_ref[...] = (y + b2_ref[0]).astype(o_ref.dtype)   # output bias added once


def h_w_model_forward(x, w1, b1, w2, b2, *, max_tile_rows=2048, force_pallas=False):
    """x: (B, D) f32; w1: (D, H); b1: (H,); w2: (H,); b2: (1,) -> (B, 1) f32."""
    B, D = x.shape
    H = w1.shape[1]

    x = x.astype(jnp.float32)
    w1 = w1.astype(jnp.float32)
    b1 = b1.astype(jnp.float32)
    w2 = w2.astype(jnp.float32)
    b2 = b2.astype(jnp.float32)

    # Small-batch fast path: a fused XLA expression beats pad+transpose+kernel+slice.
    if B < 1024 and not force_pallas:
        h = jnp.maximum(x @ w1 + b1[None, :], 0.0)
        return h @ w2[:, None] + b2[None, :]

    # ---- dense (rows, 128) working layout ----------------------------------
    # Batch columns are grouped into rows of 128 lanes; rows are padded to a
    # multiple of 8 (sublane granularity) so every block obeys the (8,128) rule.
    rows = pl.cdiv(B, 128)
    rows8 = pl.cdiv(rows, 8) * 8

    tile_r = max(8, (min(max_tile_rows, rows8) // 8) * 8)
    # If one tile would cover everything, split in two so the "parallel" grid axis
    # can actually be sharded across both v7x TensorCores.
    if pl.cdiv(rows8, tile_r) == 1 and rows8 >= 16:
        tile_r = pl.cdiv(pl.cdiv(rows8, 2), 8) * 8
    n_tiles = pl.cdiv(rows8, tile_r)
    rows_p = n_tiles * tile_r
    Bp = rows_p * 128

    # Feature-major, zero-padded working copy: (D, rows_p, 128).
    # TODO(synk): fuse/eliminate this transpose upstream for large-batch callers.
    x_t = (
        jnp.zeros((D, Bp), jnp.float32)
        .at[:, :B]
        .set(x.T)
        .reshape(D, rows_p, 128)
    )

    smem_spec = pl.BlockSpec(memory_space=pltpu.MemorySpace.SMEM)

    # Double-buffered VMEM footprint for this tile (+ headroom); keep it explicit so
    # large tiles don't trip v5e's 16 MiB scoped default, capped safely for v7x.
    tile_bytes = tile_r * 128 * 4 * (D + 1)
    vmem_limit = int(min(max(2 * tile_bytes + (4 << 20), 32 << 20), 56 << 20))

    out = pl.pallas_call(
        _mlp_kernel,
        out_shape=jax.ShapeDtypeStruct((rows_p, 128), jnp.float32),
        grid=(n_tiles,),
        in_specs=[
            pl.BlockSpec((D, tile_r, 128), lambda i: (0, i, 0)),  # x planes (dense)
            smem_spec,                                            # w1 (D, H)
            smem_spec,                                            # b1 (H,)
            smem_spec,                                            # w2 (H,)
            smem_spec,                                            # b2 (1,)
        ],
        out_specs=pl.BlockSpec((tile_r, 128), lambda i: (i, 0)),
        compiler_params=pltpu.CompilerParams(
            dimension_semantics=("parallel",),       # megacore-shard the batch axis
            vmem_limit_bytes=vmem_limit,
        ),
        cost_estimate=pl.CostEstimate(
            flops=2 * Bp * (D * H + H),
            transcendentals=0,
            bytes_accessed=4 * (Bp * (D + 1) + D * H + 2 * H + 1),
        ),
    )(x_t, w1, b1, w2, b2)

    return out.reshape(-1)[:B].reshape(B, 1)


def init_params(key, input_dim, hidden_dim=2):
    """Deterministic init mirroring nn.Linear defaults (weights stored transposed)."""
    k1, k2, k3, k4 = jax.random.split(key, 4)
    lim1 = 1.0 / jnp.sqrt(input_dim)
    lim2 = 1.0 / jnp.sqrt(hidden_dim)
    w1 = jax.random.uniform(k1, (input_dim, hidden_dim), jnp.float32, -lim1, lim1)
    b1 = jax.random.uniform(k2, (hidden_dim,), jnp.float32, -lim1, lim1)
    w2 = jax.random.uniform(k3, (hidden_dim,), jnp.float32, -lim2, lim2)
    b2 = jax.random.uniform(k4, (1,), jnp.float32, -lim2, lim2)
    return w1, b1, w2, b2


def _reference(x, w1, b1, w2, b2):
    return jnp.maximum(x @ w1 + b1[None, :], 0.0) @ w2[:, None] + b2[None, :]


if __name__ == "__main__":
    key = jax.random.PRNGKey(0)
    kx, kp = jax.random.split(key)

    batch, input_dim, hidden_dim = 8, 4, 2   # small shapes consistent with a CSV-feature MLP
    x = jax.random.normal(kx, (batch, input_dim), dtype=jnp.float32)
    w1, b1, w2, b2 = init_params(kp, input_dim, hidden_dim)
    ref = _reference(x, w1, b1, w2, b2)

    # 1) Pallas kernel path (forced; B=8 would normally take the fast path).
    out_k = jax.block_until_ready(h_w_model_forward(x, w1, b1, w2, b2, force_pallas=True))
    assert out_k.shape == (batch, 1)
    assert jnp.allclose(out_k, ref, atol=1e-5, rtol=1e-5)

    # 2) Small-batch fast path (what a B=8 call actually uses).
    out_f = jax.block_until_ready(h_w_model_forward(x, w1, b1, w2, b2))
    assert jnp.allclose(out_f, ref, atol=1e-5, rtol=1e-5)

    # 3) Multi-tile Pallas run exercising grid iteration + batch padding.
    batch2 = 2500
    x2 = jax.random.normal(jax.random.PRNGKey(1), (batch2, input_dim), dtype=jnp.float32)
    ref2 = _reference(x2, w1, b1, w2, b2)
    out2 = jax.block_until_ready(
        h_w_model_forward(x2, w1, b1, w2, b2, max_tile_rows=8, force_pallas=True)
    )
    assert out2.shape == (batch2, 1)
    assert jnp.allclose(out2, ref2, atol=1e-5, rtol=1e-5)

    print("KERNEL_OK")
</pallas_src>

<mosaic_0001>
module attributes {stable_mosaic.version = 11 : i64} {
  func.func @_mlp_kernel(%arg0: i32, %arg1: memref<4x8x128xf32, #tpu.memory_space<vmem>>, %arg2: memref<4x2xf32, #tpu.memory_space<smem>>, %arg3: memref<2xf32, #tpu.memory_space<smem>>, %arg4: memref<2xf32, #tpu.memory_space<smem>>, %arg5: memref<1xf32, #tpu.memory_space<smem>>, %arg6: memref<8x128xf32, #tpu.memory_space<vmem>>) attributes {dimension_semantics = [#tpu.dimension_semantics<parallel>], iteration_bounds = array<i64: 1>, scalar_prefetch = 0 : i64, scratch_operands = 0 : i64, tpu.core_type = #tpu.core_type<tc>, window_params = [{transform_indices = @transform_0, window_bounds = array<i64: 4, 8, 128>}, {transform_indices = @transform_1, window_bounds = array<i64: 4, 2>}, {transform_indices = @transform_2, window_bounds = array<i64: 2>}, {transform_indices = @transform_3, window_bounds = array<i64: 2>}, {transform_indices = @transform_4, window_bounds = array<i64: 1>}, {transform_indices = @transform_5, window_bounds = array<i64: 8, 128>}]} {
    %c0 = arith.constant 0 : index
    %c0_0 = arith.constant 0 : index
    %c0_1 = arith.constant 0 : index
    %0 = vector.load %arg1[%c0, %c0_0, %c0_1] : memref<4x8x128xf32, #tpu.memory_space<vmem>>, vector<1x8x128xf32>
    %1 = vector.shape_cast %0 : vector<1x8x128xf32> to vector<8x128xf32>
    %c0_2 = arith.constant 0 : index
    %c0_3 = arith.constant 0 : index
    %2 = memref.load %arg2[%c0_2, %c0_3] : memref<4x2xf32, #tpu.memory_space<smem>>
    %3 = vector.broadcast %2 : f32 to vector<8x128xf32>
    %4 = arith.mulf %1, %3 : vector<8x128xf32>
    %c0_4 = arith.constant 0 : index
    %5 = memref.load %arg3[%c0_4] : memref<2xf32, #tpu.memory_space<smem>>
    %6 = vector.broadcast %5 : f32 to vector<8x128xf32>
    %7 = arith.addf %4, %6 : vector<8x128xf32>
    %c1 = arith.constant 1 : index
    %c0_5 = arith.constant 0 : index
    %c0_6 = arith.constant 0 : index
    %8 = vector.load %arg1[%c1, %c0_5, %c0_6] : memref<4x8x128xf32, #tpu.memory_space<vmem>>, vector<1x8x128xf32>
    %9 = vector.shape_cast %8 : vector<1x8x128xf32> to vector<8x128xf32>
    %c1_7 = arith.constant 1 : index
    %c0_8 = arith.constant 0 : index
    %10 = memref.load %arg2[%c1_7, %c0_8] : memref<4x2xf32, #tpu.memory_space<smem>>
    %11 = vector.broadcast %10 : f32 to vector<8x128xf32>
    %12 = arith.mulf %9, %11 : vector<8x128xf32>
    %13 = arith.addf %7, %12 : vector<8x128xf32>
    %c2 = arith.constant 2 : index
    %c0_9 = arith.constant 0 : index
    %c0_10 = arith.constant 0 : index
    %14 = vector.load %arg1[%c2, %c0_9, %c0_10] : memref<4x8x128xf32, #tpu.memory_space<vmem>>, vector<1x8x128xf32>
    %15 = vector.shape_cast %14 : vector<1x8x128xf32> to vector<8x128xf32>
    %c2_11 = arith.constant 2 : index
    %c0_12 = arith.constant 0 : index
    %16 = memref.load %arg2[%c2_11, %c0_12] : memref<4x2xf32, #tpu.memory_space<smem>>
    %17 = vector.broadcast %16 : f32 to vector<8x128xf32>
    %18 = arith.mulf %15, %17 : vector<8x128xf32>
    %19 = arith.addf %13, %18 : vector<8x128xf32>
    %c3 = arith.constant 3 : index
    %c0_13 = arith.constant 0 : index
    %c0_14 = arith.constant 0 : index
    %20 = vector.load %arg1[%c3, %c0_13, %c0_14] : memref<4x8x128xf32, #tpu.memory_space<vmem>>, vector<1x8x128xf32>
    %21 = vector.shape_cast %20 : vector<1x8x128xf32> to vector<8x128xf32>
    %c3_15 = arith.constant 3 : index
    %c0_16 = arith.constant 0 : index
    %22 = memref.load %arg2[%c3_15, %c0_16] : memref<4x2xf32, #tpu.memory_space<smem>>
    %23 = vector.broadcast %22 : f32 to vector<8x128xf32>
    %24 = arith.mulf %21, %23 : vector<8x128xf32>
    %25 = arith.addf %19, %24 : vector<8x128xf32>
    %cst = arith.constant 0.000000e+00 : f32
    %26 = vector.broadcast %cst : f32 to vector<8x128xf32>
    %27 = arith.maximumf %25, %26 : vector<8x128xf32>
    %c0_17 = arith.constant 0 : index
    %28 = memref.load %arg4[%c0_17] : memref<2xf32, #tpu.memory_space<smem>>
    %29 = vector.broadcast %28 : f32 to vector<8x128xf32>
    %30 = arith.mulf %27, %29 : vector<8x128xf32>
    %c0_18 = arith.constant 0 : index
    %c0_19 = arith.constant 0 : index
    %c0_20 = arith.constant 0 : index
    %31 = vector.load %arg1[%c0_18, %c0_19, %c0_20] : memref<4x8x128xf32, #tpu.memory_space<vmem>>, vector<1x8x128xf32>
    %32 = vector.shape_cast %31 : vector<1x8x128xf32> to vector<8x128xf32>
    %c0_21 = arith.constant 0 : index
    %c1_22 = arith.constant 1 : index
    %33 = memref.load %arg2[%c0_21, %c1_22] : memref<4x2xf32, #tpu.memory_space<smem>>
    %34 = vector.broadcast %33 : f32 to vector<8x128xf32>
    %35 = arith.mulf %32, %34 : vector<8x128xf32>
    %c1_23 = arith.constant 1 : index
    %36 = memref.load %arg3[%c1_23] : memref<2xf32, #tpu.memory_space<smem>>
    %37 = vector.broadcast %36 : f32 to vector<8x128xf32>
    %38 = arith.addf %35, %37 : vector<8x128xf32>
    %c1_24 = arith.constant 1 : index
    %c0_25 = arith.constant 0 : index
    %c0_26 = arith.constant 0 : index
    %39 = vector.load %arg1[%c1_24, %c0_25, %c0_26] : memref<4x8x128xf32, #tpu.memory_space<vmem>>, vector<1x8x128xf32>
    %40 = vector.shape_cast %39 : vector<1x8x128xf32> to vector<8x128xf32>
    %c1_27 = arith.constant 1 : index
    %c1_28 = arith.constant 1 : index
    %41 = memref.load %arg2[%c1_27, %c1_28] : memref<4x2xf32, #tpu.memory_space<smem>>
    %42 = vector.broadcast %41 : f32 to vector<8x128xf32>
    %43 = arith.mulf %40, %42 : vector<8x128xf32>
    %44 = arith.addf %38, %43 : vector<8x128xf32>
    %c2_29 = arith.constant 2 : index
    %c0_30 = arith.constant 0 : index
    %c0_31 = arith.constant 0 : index
    %45 = vector.load %arg1[%c2_29, %c0_30, %c0_31] : memref<4x8x128xf32, #tpu.memory_space<vmem>>, vector<1x8x128xf32>
    %46 = vector.shape_cast %45 : vector<1x8x128xf32> to vector<8x128xf32>
    %c2_32 = arith.constant 2 : index
    %c1_33 = arith.constant 1 : index
    %47 = memref.load %arg2[%c2_32, %c1_33] : memref<4x2xf32, #tpu.memory_space<smem>>
    %48 = vector.broadcast %47 : f32 to vector<8x128xf32>
    %49 = arith.mulf %46, %48 : vector<8x128xf32>
    %50 = arith.addf %44, %49 : vector<8x128xf32>
    %c3_34 = arith.constant 3 : index
    %c0_35 = arith.constant 0 : index
    %c0_36 = arith.constant 0 : index
    %51 = vector.load %arg1[%c3_34, %c0_35, %c0_36] : memref<4x8x128xf32, #tpu.memory_space<vmem>>, vector<1x8x128xf32>
    %52 = vector.shape_cast %51 : vector<1x8x128xf32> to vector<8x128xf32>
    %c3_37 = arith.constant 3 : index
    %c1_38 = arith.constant 1 : index
    %53 = memref.load %arg2[%c3_37, %c1_38] : memref<4x2xf32, #tpu.memory_space<smem>>
    %54 = vector.broadcast %53 : f32 to vector<8x128xf32>
    %55 = arith.mulf %52, %54 : vector<8x128xf32>
    %56 = arith.addf %50, %55 : vector<8x128xf32>
    %cst_39 = arith.constant 0.000000e+00 : f32
    %57 = vector.broadcast %cst_39 : f32 to vector<8x128xf32>
    %58 = arith.maximumf %56, %57 : vector<8x128xf32>
    %c1_40 = arith.constant 1 : index
    %59 = memref.load %arg4[%c1_40] : memref<2xf32, #tpu.memory_space<smem>>
    %60 = vector.broadcast %59 : f32 to vector<8x128xf32>
    %61 = arith.mulf %58, %60 : vector<8x128xf32>
    %62 = arith.addf %30, %61 : vector<8x128xf32>
    %c0_41 = arith.constant 0 : index
    %63 = memref.load %arg5[%c0_41] : memref<1xf32, #tpu.memory_space<smem>>
    %64 = vector.broadcast %63 : f32 to vector<8x128xf32>
    %65 = arith.addf %62, %64 : vector<8x128xf32>
    %c0_42 = arith.constant 0 : index
    %c0_43 = arith.constant 0 : index
    %66 = vector.load %arg6[%c0_42, %c0_43] : memref<8x128xf32, #tpu.memory_space<vmem>>, vector<8x128xf32>
    tpu.vector_store %arg6[%c0_42, %c0_43], %65 {strides = array<i32>} : memref<8x128xf32, #tpu.memory_space<vmem>>, vector<8x128xf32>,
    return
  }
  func.func @transform_0(%arg0: i32) -> (i32, i32, i32) {
    %c0_i32 = arith.constant 0 : i32
    %c0_i32_0 = arith.constant 0 : i32
    %c0_i32_1 = arith.constant 0 : i32
    return %c0_i32, %arg0, %c0_i32_0 : i32, i32, i32
  }
  func.func @transform_1(%arg0: i32) -> (i32, i32) {
    %c0_i32 = arith.constant 0 : i32
    %c0_i32_0 = arith.constant 0 : i32
    %c0_i32_1 = arith.constant 0 : i32
    return %c0_i32, %c0_i32_0 : i32, i32
  }
  func.func @transform_2(%arg0: i32) -> i32 {
    %c0_i32 = arith.constant 0 : i32
    %c0_i32_0 = arith.constant 0 : i32
    return %c0_i32 : i32
  }
  func.func @transform_3(%arg0: i32) -> i32 {
    %c0_i32 = arith.constant 0 : i32
    %c0_i32_0 = arith.constant 0 : i32
    return %c0_i32 : i32
  }
  func.func @transform_4(%arg0: i32) -> i32 {
    %c0_i32 = arith.constant 0 : i32
    %c0_i32_0 = arith.constant 0 : i32
    return %c0_i32 : i32
  }
  func.func @transform_5(%arg0: i32) -> (i32, i32) {
    %c0_i32 = arith.constant 0 : i32
    %c0_i32_0 = arith.constant 0 : i32
    return %arg0, %c0_i32 : i32, i32
  }
}

</mosaic_0001>

<llo_original>
// kernel: tpu_custom_call.1
$region0: #{tpu_custom_call.1}
  #allocation0 [shape = 'u32[]', space=smem, size = 0x4, offset = 0x4, fixed_abs, tag = 'smem constant byte address 0x4 - core index']
  #allocation1 [shape = 'u32[144,128]{1,0:T(1,128)}', space=vmem, size = 0x12000, scoped, tag = 'internal scratch']
  #allocation2 [shape = 'f32[1]{0:T(128)S(6)}', space=smem, size = 0x200, scoped, tag = 'scoped memory for tpu_custom_call.1']
  %s0 = inlined_call_operand.hbm [shape: f32[4,8,128], index: 0, kind: input, shape index: {}]
  %s1 = inlined_call_operand.vmem [shape: f32[4,2], index: 1, kind: input, shape index: {}]
  %s2 = inlined_call_operand.vmem [shape: f32[2], index: 2, kind: input, shape index: {}]
  %s3 = inlined_call_operand.vmem [shape: f32[2], index: 3, kind: input, shape index: {}]
  %s4 = inlined_call_operand.<no memory space> [shape: f32[1], index: 4, kind: input, shape index: {}]
  %s5 = inlined_call_operand.hbm [shape: f32[8,128], index: 5, kind: output, shape index: {}]
  %s6 = sld [smem:[#allocation0]]
  $region46: #{tpu_custom_call.1} parent=0
    _
  %s8 = ssub.s32 1, %s6
  %s9 = scalar_select 0, %s8, %s6
  %10 = sst [smem:[#allocation2]] %s4
  $region1: #{tpu_custom_call.1} parent=0
    #allocation3 [shape = 'u8[16384]{0}', space=vmem, size = 0x4000, scoped, tag = 'input window, operand 0, single buffered']
    #allocation4 [shape = 's32[1]{0}', space=sflag, size = 0x4, scoped, tag = 'scoped memory for tpu_custom_call.1']
    #allocation5 [shape = 's32[1]{0}', space=sflag, size = 0x4, scoped, tag = 'scoped memory for tpu_custom_call.1']
    #allocation6 [shape = 's32[1]{0}', space=sflag, size = 0x4, scoped, tag = 'scoped memory for tpu_custom_call.1']
    #allocation7 [shape = 'u8[2048]{0}', space=smem, size = 0x800, scoped, tag = 'input window, operand 1, single buffered']
    #allocation8 [shape = 'u8[512]{0}', space=smem, size = 0x200, scoped, tag = 'input window, operand 2, single buffered']
    #allocation9 [shape = 's32[1]{0}', space=sflag, size = 0x4, scoped, tag = 'scoped memory for tpu_custom_call.1']
    #allocation10 [shape = 'u8[512]{0}', space=smem, size = 0x200, scoped, tag = 'input window, operand 3, single buffered']
    #allocation11 [shape = 'u8[4096]{0}', space=vmem, size = 0x1000, scoped, tag = 'output window, operand 0, single buffered']
    %11 = vsyncpa [#allocation4], 0
    %12 = vsyncpa [#allocation6], 0
    %13 = vsyncpa [#allocation9], 0
    %14 = vsyncpa [#allocation5], 0
    // Predicated region
    $region2: #{tpu_custom_call.1} parent=1 // pred_check
      _
    $region3: #{tpu_custom_call.1} parent=1 // pred_check_branch
      %16 = sbr.rel (0) target = $region5
    $region4: #{tpu_custom_call.1} parent=1 // pred_region
      %s18 = ssub.s32 512, 512
      %19 = vsyncadd [#allocation4], %s18
      %s20 = sshll.u32 [#allocation3], 4
      %s21 = int_to_ptr.vmem [resolvable:$true] %s20
      %26 = dma.hbm_to_vmem [thread:$0]  %s0, 512, %s21, [#allocation4], 128, 128, 8
    $region5: #{tpu_custom_call.1} parent=1 // pred_fallthru
      _
    // Predicated region
    $region6: #{tpu_custom_call.1} parent=1 // pred_check
      _
    $region7: #{tpu_custom_call.1} parent=1 // pred_check_branch
      %28 = sbr.rel (0) target = $region9
    $region8: #{tpu_custom_call.1} parent=1 // pred_region
      %s30 = ssub.s32 64, 64
      %31 = vsyncadd [#allocation6], %s30
      %s33 = sshll.u32 %s1, 4
      %s34 = int_to_ptr.vmem [resolvable:$true] %s33
      %36 = dma.vmem_to_smem %s34, 64, [#allocation7], [#allocation6]
    $region9: #{tpu_custom_call.1} parent=1 // pred_fallthru
      _
    // Predicated region
    $region10: #{tpu_custom_call.1} parent=1 // pred_check
      _
    $region11: #{tpu_custom_call.1} parent=1 // pred_check_branch
      %38 = sbr.rel (0) target = $region13
    $region12: #{tpu_custom_call.1} parent=1 // pred_region
      %s40 = ssub.s32 16, 16
      %41 = vsyncadd [#allocation9], %s40
      %s43 = sshll.u32 %s2, 4
      %s44 = int_to_ptr.vmem [resolvable:$true] %s43
      %46 = dma.vmem_to_smem %s44, 16, [#allocation8], [#allocation9]
    $region13: #{tpu_custom_call.1} parent=1 // pred_fallthru
      _
    // Predicated region
    $region14: #{tpu_custom_call.1} parent=1 // pred_check
      _
    $region15: #{tpu_custom_call.1} parent=1 // pred_check_branch
      %48 = sbr.rel (0) target = $region17
    $region16: #{tpu_custom_call.1} parent=1 // pred_region
      %s50 = ssub.s32 16, 16
      %51 = vsyncadd [#allocation9], %s50
      %s53 = sshll.u32 %s3, 4
      %s54 = int_to_ptr.vmem [resolvable:$true] %s53
      %56 = dma.vmem_to_smem %s54, 16, [#allocation10], [#allocation9]
    $region17: #{tpu_custom_call.1} parent=1 // pred_fallthru
      _
    // Predicated region
    $region18: #{tpu_custom_call.1} parent=1 // pred_check
      _
    $region19: #{tpu_custom_call.1} parent=1 // pred_check_branch
      %58 = sbr.rel (0) target = $region21
    $region20: #{tpu_custom_call.1} parent=1 // pred_region
      _
    $region21: #{tpu_custom_call.1} parent=1 // pred_fallthru
      _
    // Predicated region
    $region22: #{tpu_custom_call.1} parent=1 // pred_check
      _
    $region23: #{tpu_custom_call.1} parent=1 // pred_check_branch
      %60 = sbr.rel (0) target = $region25
    $region24: #{tpu_custom_call.1} parent=1 // pred_region
      %61 = dma.done [#allocation4], 512
    $region25: #{tpu_custom_call.1} parent=1 // pred_fallthru
      _
    // Predicated region
    $region26: #{tpu_custom_call.1} parent=1 // pred_check
      _
    $region27: #{tpu_custom_call.1} parent=1 // pred_check_branch
      %63 = sbr.rel (0) target = $region29
    $region28: #{tpu_custom_call.1} parent=1 // pred_region
      %64 = dma.done [#allocation6], 64
    $region29: #{tpu_custom_call.1} parent=1 // pred_fallthru
      _
    // Predicated region
    $region30: #{tpu_custom_call.1} parent=1 // pred_check
      _
    $region31: #{tpu_custom_call.1} parent=1 // pred_check_branch
      %66 = sbr.rel (0) target = $region33
    $region32: #{tpu_custom_call.1} parent=1 // pred_region
      %67 = dma.done [#allocation9], 16
    $region33: #{tpu_custom_call.1} parent=1 // pred_fallthru
      _
    // Predicated region
    $region34: #{tpu_custom_call.1} parent=1 // pred_check
      _
    $region35: #{tpu_custom_call.1} parent=1 // pred_check_branch
      %69 = sbr.rel (0) target = $region37
    $region36: #{tpu_custom_call.1} parent=1 // pred_region
      %70 = dma.done [#allocation9], 16
    $region37: #{tpu_custom_call.1} parent=1 // pred_fallthru
      _
    %71 = sfence
    %v72 = vld [vmem:[#allocation3] sm:$0xff]
    %s73 = sld [smem:[#allocation7]]
    %v74 = vstv %s73
    %v75 = vmul.f32 %v72, %v74
    %s76 = sld [smem:[#allocation8]]
    %v77 = vstv %s76
    %v78 = vadd.f32 %v75, %v77
    %s79 = scalar_lea.vmem [#allocation3], 8
    %v80 = vld [vmem:[%s79] sm:$0xff]
    %s81 = sld [smem:[#allocation7 + $0x80]]
    %v82 = vstv %s81
    %v83 = vmul.f32 %v80, %v82
    %v84 = vadd.f32 %v78, %v83
    %s85 = scalar_lea.vmem [#allocation3], 16
    %v86 = vld [vmem:[%s85] sm:$0xff]
    %s87 = sld [smem:[#allocation7 + $0x100]]
    %v88 = vstv %s87
    %v89 = vmul.f32 %v86, %v88
    %v90 = vadd.f32 %v84, %v89
    %s91 = scalar_lea.vmem [#allocation3], 24
    %v92 = vld [vmem:[%s91] sm:$0xff]
    %s93 = sld [smem:[#allocation7 + $0x180]]
    %v94 = vstv %s93
    %v95 = vmul.f32 %v92, %v94
    %v96 = vadd.f32 %v90, %v95
    %v97 = vmax.f32 %v96, 0.0
    %s98 = sld [smem:[#allocation10]]
    %v99 = vstv %s98
    %v100 = vmul.f32 %v97, %v99
    %s101 = sld [smem:[#allocation7 + $0x1]]
    %v102 = vstv %s101
    %v103 = vmul.f32 %v72, %v102
    %s104 = sld [smem:[#allocation8 + $0x1]]
    %v105 = vstv %s104
    %v106 = vadd.f32 %v103, %v105
    %s107 = sld [smem:[#allocation7 + $0x81]]
    %v108 = vstv %s107
    %v109 = vmul.f32 %v80, %v108
    %v110 = vadd.f32 %v106, %v109
    %s111 = sld [smem:[#allocation7 + $0x101]]
    %v112 = vstv %s111
    %v113 = vmul.f32 %v86, %v112
    %v114 = vadd.f32 %v110, %v113
    %s115 = sld [smem:[#allocation7 + $0x181]]
    %v116 = vstv %s115
    %v117 = vmul.f32 %v92, %v116
    %v118 = vadd.f32 %v114, %v117
    %v119 = vmax.f32 %v118, 0.0
    %s120 = sld [smem:[#allocation10 + $0x1]]
    %v121 = vstv %s120
    %v122 = vmul.f32 %v119, %v121
    %v123 = vadd.f32 %v100, %v122
    %s124 = sld [smem:[#allocation2]]
    %v125 = vstv %s124
    %v126 = vadd.f32 %v123, %v125
    %127 = vst [vmem:[#allocation11] sm:$0xff] %v126
    // Predicated region
    $region38: #{tpu_custom_call.1} parent=1 // pred_check
      _
    $region39: #{tpu_custom_call.1} parent=1 // pred_check_branch
      %129 = sbr.rel (0) target = $region41
    $region40: #{tpu_custom_call.1} parent=1 // pred_region
      %s131 = ssub.s32 128, 128
      %132 = vsyncadd [#allocation5], %s131
      %s134 = sshll.u32 [#allocation11], 4
      %s135 = int_to_ptr.vmem [resolvable:$true] %s134
      %137 = dma.vmem_to_hbm [thread:$0]  %s135, 128, %s5, [#allocation5]
    $region41: #{tpu_custom_call.1} parent=1 // pred_fallthru
      _
    // Predicated region
    $region42: #{tpu_custom_call.1} parent=1 // pred_check
      _
    $region43: #{tpu_custom_call.1} parent=1 // pred_check_branch
      %139 = sbr.rel (0) target = $region45
    $region44: #{tpu_custom_call.1} parent=1 // pred_region
      %140 = dma.done [#allocation5], 128
    $region45: #{tpu_custom_call.1} parent=1 // pred_fallthru
      _
    %141 = vsyncpa [#allocation4], 1
    %142 = vsyncpa [#allocation5], 1
    %143 = vsyncpa [#allocation6], 1
    %144 = vsyncpa [#allocation9], 1

</llo_original>
